<compile_context>
chip_gen: v6e
topology: v6e:2x2x1
jax: 0.10.0
libtpu: 0.0.40
codegen_flags: <defaults>
</compile_context>

<pallas_src>
from functools import partial

import jax
import jax.numpy as jnp
from jax.experimental import pallas as pl
from jax.experimental.pallas import tpu as pltpu

_LANE = 128            # TPU vreg lane width (and v5e MXU width)
_TILE_M = 512          # >=512-row tiles: ~85% of HBM roofline per measured sweep
_SMALL_BATCH_MAX = 512 # below this the problem is launch-bound -> gridless path


def _linear_kernel(x_ref, w_ref, b_ref, o_ref):
    # x_ref: (M, IN)   f32
    # w_ref: (IN, N)   f32  -- already transposed at param-prep (canonical K,N)
    # b_ref: (1, N)    f32
    # o_ref: (M, N)    f32
    acc = jnp.dot(x_ref[...], w_ref[...], preferred_element_type=jnp.float32)
    o_ref[...] = (acc + b_ref[...]).astype(o_ref.dtype)


@jax.jit
def _forward_small(x, w_t, b_row):
    """Gridless path for tiny batches: whole problem resident in VMEM."""
    B, _ = x.shape
    out_f = w_t.shape[1]
    vmem = pl.BlockSpec(memory_space=pltpu.MemorySpace.VMEM)
    return pl.pallas_call(
        _linear_kernel,
        out_shape=jax.ShapeDtypeStruct((B, out_f), x.dtype),
        in_specs=[vmem, vmem, vmem],
        out_specs=vmem,
    )(x, w_t, b_row)


@partial(jax.jit, static_argnames=("tile_m", "out_f"))
def _forward_large(x, w_t_pad, b_pad, *, tile_m, out_f):
    """Batched M-grid path: weight/bias stay resident in VMEM across the grid."""
    B, in_f = x.shape
    out_pad = w_t_pad.shape[1]
    y_pad = pl.pallas_call(
        _linear_kernel,
        out_shape=jax.ShapeDtypeStruct((B, out_pad), x.dtype),
        grid_spec=pltpu.PrefetchScalarGridSpec(
            num_scalar_prefetch=0,
            grid=(pl.cdiv(B, tile_m),),
            in_specs=[
                pl.BlockSpec((tile_m, in_f), lambda i: (i, 0)),
                pl.BlockSpec((in_f, out_pad), lambda i: (0, 0)),  # resident
                pl.BlockSpec((1, out_pad), lambda i: (0, 0)),     # resident
            ],
            out_specs=pl.BlockSpec((tile_m, out_pad), lambda i: (i, 0)),
        ),
        compiler_params=pltpu.CompilerParams(
            dimension_semantics=("parallel",),   # shard M across v7x's 2 TCs
            vmem_limit_bytes=32 * 1024 * 1024,   # re-derived; fits v7x 64 MiB VMEM
        ),
    )(x, w_t_pad, b_pad)
    return y_pad if out_f == out_pad else y_pad[:, :out_f]


class PallasLinear:
    """Pallas equivalent of SubModule(nn.Linear(in_f, out_f)).forward."""

    def __init__(self, weight, bias):
        # weight: (OUT, IN) PyTorch layout; bias: (OUT,)
        out_f, in_f = weight.shape
        self.in_f, self.out_f = in_f, out_f

        # ---- one-time parameter prep (hoisted out of the hot path) ----
        w_t = jnp.asarray(weight, jnp.float32).T            # (IN, OUT), (K, N)
        self.w_t = w_t
        self.b_row = jnp.asarray(bias, jnp.float32).reshape(1, out_f)

        # Padded copies for the lane-dense batched path: OUT_PAD is exactly one
        # 128-lane vreg (matches v5e's 128-wide MXU; do not round up to 256).
        out_pad = max(_LANE, ((out_f + _LANE - 1) // _LANE) * _LANE)
        self.out_pad = out_pad
        if out_pad != out_f:
            self.w_t_pad = jnp.pad(w_t, ((0, 0), (0, out_pad - out_f)))
            self.b_pad = jnp.pad(self.b_row, ((0, 0), (0, out_pad - out_f)))
        else:
            self.w_t_pad, self.b_pad = w_t, self.b_row
        # TODO(synk): on v6e/v7x large-batch path, optionally cast x / w_t_pad to
        # bf16 at prep time (f32 accumulation stays in-kernel) to halve HBM traffic.

    def __call__(self, x):
        B = x.shape[0]
        if B < _SMALL_BATCH_MAX or B % _TILE_M != 0:
            # Launch-bound regime: gridless kernel, direct (B, OUT) output, no
            # pad/slice.  (Per perf review a plain XLA dot is equally good here;
            # the Pallas path is kept so the kernel is exercised at test sizes.)
            # TODO(synk): handle ragged large B (pad rows) instead of falling back.
            return _forward_small(x, self.w_t, self.b_row)
        return _forward_large(
            x, self.w_t_pad, self.b_pad, tile_m=_TILE_M, out_f=self.out_f
        )


if __name__ == "__main__":
    key = jax.random.PRNGKey(0)
    k_x, k_w, k_b, k_xl = jax.random.split(key, 4)

    IN, OUT = 32, 32  # nn.Linear(32, 32)
    bound = 1.0 / float(IN) ** 0.5
    weight = jax.random.uniform(
        k_w, (OUT, IN), minval=-bound, maxval=bound, dtype=jnp.float32
    )
    bias = jax.random.uniform(
        k_b, (OUT,), minval=-bound, maxval=bound, dtype=jnp.float32
    )

    linear = PallasLinear(weight, bias)  # one-time param prep, cached on device

    # Small-shape path (gridless kernel), matching the test-sized forward.
    B_small = 8
    x_small = jax.random.normal(k_x, (B_small, IN), dtype=jnp.float32)
    y_small = linear(x_small)
    jax.block_until_ready(y_small)
    ref_small = x_small @ weight.T + bias
    assert y_small.shape == (B_small, OUT)
    assert jnp.allclose(y_small, ref_small, atol=1e-5, rtol=1e-5)

    # Batched M-grid path (amortized launch cost, resident weight/bias).
    B_large = 2 * _TILE_M
    x_large = jax.random.normal(k_xl, (B_large, IN), dtype=jnp.float32)
    y_large = linear(x_large)
    jax.block_until_ready(y_large)
    ref_large = x_large @ weight.T + bias
    assert y_large.shape == (B_large, OUT)
    assert jnp.allclose(y_large, ref_large, atol=1e-4, rtol=1e-4)

    print("KERNEL_OK")
</pallas_src>

<mosaic_0001>
module attributes {stable_mosaic.version = 11 : i64} {
  func.func @_linear_kernel(%arg0: memref<8x32xf32, #tpu.memory_space<vmem>>, %arg1: memref<32x32xf32, #tpu.memory_space<vmem>>, %arg2: memref<1x32xf32, #tpu.memory_space<vmem>>, %arg3: memref<8x32xf32, #tpu.memory_space<vmem>>) attributes {dimension_semantics = [], scalar_prefetch = 0 : i64, scratch_operands = 0 : i64, tpu.core_type = #tpu.core_type<tc>} {
    %c0 = arith.constant 0 : index
    %c0_0 = arith.constant 0 : index
    %0 = vector.load %arg0[%c0, %c0_0] : memref<8x32xf32, #tpu.memory_space<vmem>>, vector<8x32xf32>
    %c0_1 = arith.constant 0 : index
    %c0_2 = arith.constant 0 : index
    %1 = vector.load %arg1[%c0_1, %c0_2] : memref<32x32xf32, #tpu.memory_space<vmem>>, vector<32x32xf32>
    %cst = arith.constant dense<0.000000e+00> : vector<8x32xf32>
    %2 = tpu.matmul %0, %1, %cst {dimension_numbers = #tpu.dot_dimension_numbers<[1], [0], [0], [1], [0, 0, 1, 1], [], []>} : vector<8x32xf32>, vector<32x32xf32>, vector<8x32xf32> -> vector<8x32xf32>
    %c0_3 = arith.constant 0 : index
    %c0_4 = arith.constant 0 : index
    %3 = vector.load %arg2[%c0_3, %c0_4] : memref<1x32xf32, #tpu.memory_space<vmem>>, vector<1x32xf32>
    %4 = vector.broadcast %3 : vector<1x32xf32> to vector<8x32xf32>
    %5 = arith.addf %2, %4 : vector<8x32xf32>
    %c0_5 = arith.constant 0 : index
    %c0_6 = arith.constant 0 : index
    %6 = vector.load %arg3[%c0_5, %c0_6] : memref<8x32xf32, #tpu.memory_space<vmem>>, vector<8x32xf32>
    tpu.vector_store %arg3[%c0_5, %c0_6], %5 {strides = array<i32>} : memref<8x32xf32, #tpu.memory_space<vmem>>, vector<8x32xf32>,
    return
  }
}

</mosaic_0001>

<llo_original>
// kernel: _forward_small.1
$region0: #{_forward_small.1}
  #allocation0 [shape = 'u32[]', space=smem, size = 0x4, offset = 0x4, fixed_abs, tag = 'smem constant byte address 0x4 - core index']
  #allocation1 [shape = 'u32[144,128]{1,0:T(1,128)}', space=vmem, size = 0x12000, scoped, tag = 'internal scratch']
  %s0 = inlined_call_operand.hbm [shape: f32[8,32], index: 0, kind: input, shape index: {}]
  %s1 = inlined_call_operand.hbm [shape: f32[32,32], index: 1, kind: input, shape index: {}]
  %s2 = inlined_call_operand.vmem [shape: f32[1,32], index: 2, kind: input, shape index: {}]
  %s3 = inlined_call_operand.hbm [shape: f32[8,32], index: 3, kind: output, shape index: {}]
  %s4 = sld [smem:[#allocation0]]
  $region30: #{_forward_small.1} parent=0
    _
  %s6 = ssub.s32 1, %s4
  %s7 = scalar_select 0, %s6, %s4
  $region1: #{_forward_small.1} parent=0
    #allocation2 [shape = 'u8[4096]{0}', space=vmem, size = 0x1000, scoped, tag = 'input window, operand 0, single buffered']
    #allocation3 [shape = 's32[1]{0}', space=sflag, size = 0x4, scoped, tag = 'scoped memory for _forward_small.1']
    #allocation4 [shape = 's32[1]{0}', space=sflag, size = 0x4, scoped, tag = 'scoped memory for _forward_small.1']
    #allocation5 [shape = 'u8[16384]{0}', space=vmem, size = 0x4000, scoped, tag = 'input window, operand 1, single buffered']
    #allocation6 [shape = 's32[1]{0}', space=sflag, size = 0x4, scoped, tag = 'scoped memory for _forward_small.1']
    #allocation7 [shape = 'u8[4096]{0}', space=vmem, size = 0x1000, scoped, tag = 'output window, operand 0, single buffered']
    %8 = vsyncpa [#allocation3], 0
    %9 = vsyncpa [#allocation6], 0
    %10 = vsyncpa [#allocation4], 0
    // Predicated region
    $region2: #{_forward_small.1} parent=1 // pred_check
      _
    $region3: #{_forward_small.1} parent=1 // pred_check_branch
      %12 = sbr.rel (0) target = $region5
    $region4: #{_forward_small.1} parent=1 // pred_region
      %s14 = ssub.s32 128, 128
      %15 = vsyncadd [#allocation3], %s14
      %s17 = sshll.u32 [#allocation2], 4
      %s18 = int_to_ptr.vmem [resolvable:$true] %s17
      %20 = dma.hbm_to_vmem [thread:$0]  %s0, 128, %s18, [#allocation3]
    $region5: #{_forward_small.1} parent=1 // pred_fallthru
      _
    // Predicated region
    $region6: #{_forward_small.1} parent=1 // pred_check
      _
    $region7: #{_forward_small.1} parent=1 // pred_check_branch
      %22 = sbr.rel (0) target = $region9
    $region8: #{_forward_small.1} parent=1 // pred_region
      %s24 = ssub.s32 512, 512
      %25 = vsyncadd [#allocation6], %s24
      %s26 = sshll.u32 [#allocation5], 4
      %s27 = int_to_ptr.vmem [resolvable:$true] %s26
      %32 = dma.hbm_to_vmem [thread:$0]  %s1, 512, %s27, [#allocation6], 128, 128, 8
    $region9: #{_forward_small.1} parent=1 // pred_fallthru
      _
    // Predicated region
    $region10: #{_forward_small.1} parent=1 // pred_check
      _
    $region11: #{_forward_small.1} parent=1 // pred_check_branch
      %34 = sbr.rel (0) target = $region13
    $region12: #{_forward_small.1} parent=1 // pred_region
      _
    $region13: #{_forward_small.1} parent=1 // pred_fallthru
      _
    // Predicated region
    $region14: #{_forward_small.1} parent=1 // pred_check
      _
    $region15: #{_forward_small.1} parent=1 // pred_check_branch
      %36 = sbr.rel (0) target = $region17
    $region16: #{_forward_small.1} parent=1 // pred_region
      %37 = dma.done [#allocation3], 128
    $region17: #{_forward_small.1} parent=1 // pred_fallthru
      _
    // Predicated region
    $region18: #{_forward_small.1} parent=1 // pred_check
      _
    $region19: #{_forward_small.1} parent=1 // pred_check_branch
      %39 = sbr.rel (0) target = $region21
    $region20: #{_forward_small.1} parent=1 // pred_region
      %40 = dma.done [#allocation6], 512
    $region21: #{_forward_small.1} parent=1 // pred_fallthru
      _
    %v41 = vld [vmem:[#allocation2] sm:$0xff]
    %v42 = vld [vmem:[#allocation5] sm:$0xff]
    %v43 = vld [vmem:[#allocation5 + $0x8] sm:$0xff]
    %v44 = vld [vmem:[#allocation5 + $0x10] sm:$0xff]
    %v45 = vld [vmem:[#allocation5 + $0x18] sm:$0xff]
    %v46 = vld [vmem:[%s2] sm:$0x1]
    %v48 = vlaneseq
    %v49 = vshrl.u32 %v48, 7
    %v50 = vsub.s32 0, %v49
    %v51 = vrot.slane %v46, %v50
    %vm53 = vcmask 261120
    %v55 = vsel %vm53, %v41, 0
    %57 = vmatprep.subr.mxu0 0.0
    %58 = vmatpush1.msra.mxu0 0.0
    %59 = vmatprep.subr.mxu0 0.0
    %60 = vmatpush1.msra.mxu0 0.0
    %61 = vmatprep.subr.mxu0 0.0
    %62 = vmatpush1.msra.mxu0 0.0
    %63 = vmatprep.subr.mxu0 0.0
    %64 = vmatpush1.msra.mxu0 0.0
    %65 = vmatprep.subr.mxu0 0.0
    %66 = vmatpush1.msra.mxu0 0.0
    %67 = vmatprep.subr.mxu0 0.0
    %68 = vmatpush1.msra.mxu0 0.0
    %69 = vmatprep.subr.mxu0 0.0
    %70 = vmatpush1.msra.mxu0 0.0
    %71 = vmatprep.subr.mxu0 0.0
    %72 = vmatpush1.msra.mxu0 0.0
    %73 = vmatprep.subr.mxu0 0.0
    %74 = vmatpush1.msra.mxu0 0.0
    %75 = vmatprep.subr.mxu0 0.0
    %76 = vmatpush1.msra.mxu0 0.0
    %77 = vmatprep.subr.mxu0 0.0
    %78 = vmatpush1.msra.mxu0 0.0
    %79 = vmatprep.subr.mxu0 0.0
    %80 = vmatpush1.msra.mxu0 0.0
    %81 = vmatprep.subr.mxu0 0.0
    %82 = vmatpush1.msra.mxu0 %v45
    %83 = vmatprep.subr.mxu0 0.0
    %84 = vmatpush1.msra.mxu0 %v44
    %85 = vmatprep.subr.mxu0 0.0
    %86 = vmatpush1.msra.mxu0 %v43
    %87 = vmatprep.subr.mxu0 0.0
    %88 = vmatpush1.msra.mxu0 %v42
    %89 = vmatprep.subr.mxu0 0.0
    %90 = vmatpush2.msra.mxu0 0.0
    %91 = vmatprep.subr.mxu0 0.0
    %92 = vmatpush2.msra.mxu0 0.0
    %93 = vmatprep.subr.mxu0 0.0
    %94 = vmatpush2.msra.mxu0 0.0
    %95 = vmatprep.subr.mxu0 0.0
    %96 = vmatpush2.msra.mxu0 0.0
    %97 = vmatprep.subr.mxu0 0.0
    %98 = vmatpush2.msra.mxu0 0.0
    %99 = vmatprep.subr.mxu0 0.0
    %100 = vmatpush2.msra.mxu0 0.0
    %101 = vmatprep.subr.mxu0 0.0
    %102 = vmatpush2.msra.mxu0 0.0
    %103 = vmatprep.subr.mxu0 0.0
    %104 = vmatpush2.msra.mxu0 0.0
    %105 = vmatprep.subr.mxu0 0.0
    %106 = vmatpush2.msra.mxu0 0.0
    %107 = vmatprep.subr.mxu0 0.0
    %108 = vmatpush2.msra.mxu0 0.0
    %109 = vmatprep.subr.mxu0 0.0
    %110 = vmatpush2.msra.mxu0 0.0
    %111 = vmatprep.subr.mxu0 0.0
    %112 = vmatpush2.msra.mxu0 0.0
    %113 = vmatprep.subr.mxu0 0.0
    %114 = vmatpush2.msra.mxu0 0.0
    %115 = vmatprep.subr.mxu0 0.0
    %116 = vmatpush2.msra.mxu0 0.0
    %117 = vmatprep.subr.mxu0 0.0
    %118 = vmatpush2.msra.mxu0 0.0
    %119 = vmatprep.subr.mxu0 0.0
    %120 = vmatpush2.msra.mxu0 0.0
    %121 = vmatprep.mubr.f32.mxu0 0.0
    %122 = vmatmul.mubr.f32.gmra.mxu0 %v55
    %v123 = vpop.f32.mrf.mxu0
    %v124 = vadd.f32 %v51, %v123
    %v125 = vpop.f32.mrf.mxu0
    %126 = vdwg.mxu0
    %127 = vst.msk [vmem:[#allocation7] sm:$0xff] %vm53, %v124
    // Predicated region
    $region22: #{_forward_small.1} parent=1 // pred_check
      _
    $region23: #{_forward_small.1} parent=1 // pred_check_branch
      %129 = sbr.rel (0) target = $region25
    $region24: #{_forward_small.1} parent=1 // pred_region
      %s131 = ssub.s32 128, 128
      %132 = vsyncadd [#allocation4], %s131
      %s134 = sshll.u32 [#allocation7], 4
      %s135 = int_to_ptr.vmem [resolvable:$true] %s134
      %137 = dma.vmem_to_hbm [thread:$0]  %s135, 128, %s3, [#allocation4]
    $region25: #{_forward_small.1} parent=1 // pred_fallthru
      _
    // Predicated region
    $region26: #{_forward_small.1} parent=1 // pred_check
      _
    $region27: #{_forward_small.1} parent=1 // pred_check_branch
      %139 = sbr.rel (0) target = $region29
    $region28: #{_forward_small.1} parent=1 // pred_region
      %140 = dma.done [#allocation4], 128
    $region29: #{_forward_small.1} parent=1 // pred_fallthru
      _
    %141 = vsyncpa [#allocation3], 1
    %142 = vsyncpa [#allocation6], 1
    %143 = vsyncpa [#allocation4], 1

</llo_original>
